<compile_context>
chip_gen: v5e
topology: v5e:2x2
jax: 0.10.0
libtpu: 0.0.40
codegen_flags: <defaults>
</compile_context>

<pallas_src>
import functools

import jax
import jax.numpy as jnp
from jax.experimental import pallas as pl
from jax.experimental.pallas import tpu as pltpu

LANE = 128
SUBLANE = 8


def _round_up(n: int, m: int) -> int:
    return ((n + m - 1) // m) * m


def _pad2(a, rows: int, cols: int):
    r, c = a.shape
    return jnp.pad(a, ((0, rows - r), (0, cols - c)))


# --------------------------------------------------------------------------- #
# Kernel                                                                      #
# --------------------------------------------------------------------------- #
def _mlp_kernel(x_ref, w1_ref, w2_ref, w3_ref, b_ref, o_ref, *,
                h1_p, h2_p, out_p, compute_dtype):
    """One batch tile: y = tanh(tanh(x@W1+b1)@W2+b2)@W3+b3 (padded, lane-dense)."""
    x = x_ref[...]                      # (tile_b, in_p), compute_dtype
    b1 = b_ref[0:1, :h1_p]              # (1, h1_p) f32
    b2 = b_ref[1:2, :h2_p]
    b3 = b_ref[2:3, :out_p]

    # matmuls on the MXU with f32 accumulation; bias-add / tanh in f32.
    h = jnp.tanh(
        jnp.dot(x, w1_ref[...], preferred_element_type=jnp.float32) + b1)
    h = jnp.tanh(
        jnp.dot(h.astype(compute_dtype), w2_ref[...],
                preferred_element_type=jnp.float32) + b2)
    o_ref[...] = (
        jnp.dot(h.astype(compute_dtype), w3_ref[...],
                preferred_element_type=jnp.float32) + b3
    ).astype(o_ref.dtype)


# --------------------------------------------------------------------------- #
# Wrapper                                                                     #
# --------------------------------------------------------------------------- #
def prepare_params(params, compute_dtype=jnp.float32):
    """One-time: pad weights to (8,128)-aligned tiles, pack biases, cast dtype.

    params: dict with w{1,2,3} shaped (in, out) (torch weight transposed) and
    b{1,2,3} shaped (1, out) or (out,).
    """
    w1, w2, w3 = params["w1"], params["w2"], params["w3"]
    b1, b2, b3 = params["b1"], params["b2"], params["b3"]
    in_dim, h1 = w1.shape
    _, h2 = w2.shape
    _, out_dim = w3.shape
    in_p, h1_p, h2_p, out_p = (_round_up(d, LANE)
                               for d in (in_dim, h1, h2, out_dim))
    p_max = max(h1_p, h2_p, out_p)

    w1p = _pad2(w1, in_p, h1_p).astype(compute_dtype)
    w2p = _pad2(w2, h1_p, h2_p).astype(compute_dtype)
    w3p = _pad2(w3, h2_p, out_p).astype(compute_dtype)

    b_packed = jnp.zeros((SUBLANE, p_max), jnp.float32)
    b_packed = b_packed.at[0, :h1].set(jnp.ravel(b1))
    b_packed = b_packed.at[1, :h2].set(jnp.ravel(b2))
    b_packed = b_packed.at[2, :out_dim].set(jnp.ravel(b3))

    return dict(w1=w1p, w2=w2p, w3=w3p, b=b_packed,
                dims=(in_dim, h1, h2, out_dim),
                padded=(in_p, h1_p, h2_p, out_p),
                compute_dtype=compute_dtype)


def neural_controller_forward(x, prepped, batch_tile=512):
    """x: (batch, state_dim) float32.  prepped: output of prepare_params."""
    batch, state_dim = x.shape
    in_p, h1_p, h2_p, out_p = prepped["padded"]
    out_dim = prepped["dims"][3]
    compute_dtype = prepped["compute_dtype"]

    # Batch tiling: single tile for small batches, fixed tile + grid otherwise.
    if batch <= batch_tile:
        tile_b = _round_up(batch, SUBLANE)
    else:
        tile_b = batch_tile
    padded_batch = _round_up(batch, tile_b)
    grid = (padded_batch // tile_b,)

    xp = jnp.pad(x, ((0, padded_batch - batch),
                     (0, in_p - state_dim))).astype(compute_dtype)

    kernel = functools.partial(_mlp_kernel, h1_p=h1_p, h2_p=h2_p, out_p=out_p,
                               compute_dtype=compute_dtype)

    out_padded = pl.pallas_call(
        kernel,
        out_shape=jax.ShapeDtypeStruct((padded_batch, out_p), jnp.float32),
        grid=grid,
        in_specs=[
            pl.BlockSpec((tile_b, in_p), lambda i: (i, 0)),        # x tile
            pl.BlockSpec((in_p, h1_p), lambda i: (0, 0)),          # W1 resident
            pl.BlockSpec((h1_p, h2_p), lambda i: (0, 0)),          # W2 resident
            pl.BlockSpec((h2_p, out_p), lambda i: (0, 0)),         # W3 resident
            pl.BlockSpec((SUBLANE, prepped["b"].shape[1]),
                         lambda i: (0, 0)),                        # packed biases
        ],
        out_specs=pl.BlockSpec((tile_b, out_p), lambda i: (i, 0)),
        compiler_params=pltpu.CompilerParams(
            dimension_semantics=("parallel",)),
    )(xp, prepped["w1"], prepped["w2"], prepped["w3"], prepped["b"])

    return out_padded[:batch, :out_dim]


# --------------------------------------------------------------------------- #
# Init + reference                                                            #
# --------------------------------------------------------------------------- #
def init_params(key, state_dim, action_dim, hidden_layers):
    """torch.nn.Linear-style uniform(+-1/sqrt(fan_in)) init; W stored (in, out)."""
    dims = (state_dim,) + tuple(hidden_layers) + (action_dim,)
    params = {}
    keys = jax.random.split(key, 2 * (len(dims) - 1))
    for i in range(len(dims) - 1):
        fan_in, fan_out = dims[i], dims[i + 1]
        bound = 1.0 / jnp.sqrt(jnp.float32(fan_in))
        params[f"w{i + 1}"] = jax.random.uniform(
            keys[2 * i], (fan_in, fan_out), jnp.float32, -bound, bound)
        params[f"b{i + 1}"] = jax.random.uniform(
            keys[2 * i + 1], (1, fan_out), jnp.float32, -bound, bound)
    return params


def reference_forward(x, params):
    h1 = jnp.tanh(x @ params["w1"] + params["b1"])
    h2 = jnp.tanh(h1 @ params["w2"] + params["b2"])
    return h2 @ params["w3"] + params["b3"]


# --------------------------------------------------------------------------- #
# Demo / self-test                                                            #
# --------------------------------------------------------------------------- #
if __name__ == "__main__":
    state_dim, action_dim = 8, 4
    hidden_layers = (32, 32)

    key = jax.random.PRNGKey(0)
    k_x1, k_x2, k_p = jax.random.split(key, 3)
    params = init_params(k_p, state_dim, action_dim, hidden_layers)

    # 1) small batch, f32 compute (single-tile path)
    x_small = jax.random.normal(k_x1, (8, state_dim), jnp.float32)
    prepped_f32 = prepare_params(params, compute_dtype=jnp.float32)
    out = jax.block_until_ready(neural_controller_forward(x_small, prepped_f32))
    ref = reference_forward(x_small, params)
    assert out.shape == (8, action_dim)
    assert jnp.allclose(out, ref, atol=1e-5, rtol=1e-5)

    # 2) non-multiple batch exercising the grid / batch-padding path
    x_big = jax.random.normal(k_x2, (300, state_dim), jnp.float32)
    out_big = jax.block_until_ready(
        neural_controller_forward(x_big, prepped_f32, batch_tile=128))
    ref_big = reference_forward(x_big, params)
    assert out_big.shape == (300, action_dim)
    assert jnp.allclose(out_big, ref_big, atol=1e-5, rtol=1e-5)

    # 3) bf16 matmul operands (v6e/v7x fast path), f32 accumulate + f32 tanh
    prepped_bf16 = prepare_params(params, compute_dtype=jnp.bfloat16)
    out_bf16 = jax.block_until_ready(
        neural_controller_forward(x_big, prepped_bf16, batch_tile=128))
    assert out_bf16.shape == (300, action_dim)
    assert jnp.allclose(out_bf16, ref_big, atol=3e-2, rtol=3e-2)

    print("KERNEL_OK")
</pallas_src>

<mosaic_0001>
module attributes {stable_mosaic.version = 11 : i64} {
  func.func @_mlp_kernel(%arg0: i32, %arg1: memref<8x128xf32, #tpu.memory_space<vmem>>, %arg2: memref<128x128xf32, #tpu.memory_space<vmem>>, %arg3: memref<128x128xf32, #tpu.memory_space<vmem>>, %arg4: memref<128x128xf32, #tpu.memory_space<vmem>>, %arg5: memref<8x128xf32, #tpu.memory_space<vmem>>, %arg6: memref<8x128xf32, #tpu.memory_space<vmem>>) attributes {dimension_semantics = [#tpu.dimension_semantics<parallel>], iteration_bounds = array<i64: 1>, scalar_prefetch = 0 : i64, scratch_operands = 0 : i64, tpu.core_type = #tpu.core_type<tc>, window_params = [{transform_indices = @transform_0, window_bounds = array<i64: 8, 128>}, {pipeline_mode = #tpu.pipeline_mode<synchronous>, transform_indices = @transform_1, window_bounds = array<i64: 128, 128>}, {pipeline_mode = #tpu.pipeline_mode<synchronous>, transform_indices = @transform_2, window_bounds = array<i64: 128, 128>}, {pipeline_mode = #tpu.pipeline_mode<synchronous>, transform_indices = @transform_3, window_bounds = array<i64: 128, 128>}, {pipeline_mode = #tpu.pipeline_mode<synchronous>, transform_indices = @transform_4, window_bounds = array<i64: 8, 128>}, {transform_indices = @transform_5, window_bounds = array<i64: 8, 128>}]} {
    %c0 = arith.constant 0 : index
    %c0_0 = arith.constant 0 : index
    %0 = vector.load %arg1[%c0, %c0_0] : memref<8x128xf32, #tpu.memory_space<vmem>>, vector<8x128xf32>
    %c0_1 = arith.constant 0 : index
    %c0_2 = arith.constant 0 : index
    %1 = vector.load %arg5[%c0_1, %c0_2] : memref<8x128xf32, #tpu.memory_space<vmem>>, vector<1x128xf32>
    %c1 = arith.constant 1 : index
    %c0_3 = arith.constant 0 : index
    %2 = vector.load %arg5[%c1, %c0_3] : memref<8x128xf32, #tpu.memory_space<vmem>>, vector<1x128xf32>
    %c2 = arith.constant 2 : index
    %c0_4 = arith.constant 0 : index
    %3 = vector.load %arg5[%c2, %c0_4] : memref<8x128xf32, #tpu.memory_space<vmem>>, vector<1x128xf32>
    %c0_5 = arith.constant 0 : index
    %c0_6 = arith.constant 0 : index
    %4 = vector.load %arg2[%c0_5, %c0_6] : memref<128x128xf32, #tpu.memory_space<vmem>>, vector<128x128xf32>
    %cst = arith.constant dense<0.000000e+00> : vector<8x128xf32>
    %5 = tpu.matmul %0, %4, %cst {dimension_numbers = #tpu.dot_dimension_numbers<[1], [0], [0], [1], [0, 0, 1, 1], [], []>} : vector<8x128xf32>, vector<128x128xf32>, vector<8x128xf32> -> vector<8x128xf32>
    %6 = vector.broadcast %1 : vector<1x128xf32> to vector<8x128xf32>
    %7 = arith.addf %5, %6 : vector<8x128xf32>
    %8 = math.tanh %7 : vector<8x128xf32>
    %c0_7 = arith.constant 0 : index
    %c0_8 = arith.constant 0 : index
    %9 = vector.load %arg3[%c0_7, %c0_8] : memref<128x128xf32, #tpu.memory_space<vmem>>, vector<128x128xf32>
    %cst_9 = arith.constant dense<0.000000e+00> : vector<8x128xf32>
    %10 = tpu.matmul %8, %9, %cst_9 {dimension_numbers = #tpu.dot_dimension_numbers<[1], [0], [0], [1], [0, 0, 1, 1], [], []>} : vector<8x128xf32>, vector<128x128xf32>, vector<8x128xf32> -> vector<8x128xf32>
    %11 = vector.broadcast %2 : vector<1x128xf32> to vector<8x128xf32>
    %12 = arith.addf %10, %11 : vector<8x128xf32>
    %13 = math.tanh %12 : vector<8x128xf32>
    %c0_10 = arith.constant 0 : index
    %c0_11 = arith.constant 0 : index
    %14 = vector.load %arg4[%c0_10, %c0_11] : memref<128x128xf32, #tpu.memory_space<vmem>>, vector<128x128xf32>
    %cst_12 = arith.constant dense<0.000000e+00> : vector<8x128xf32>
    %15 = tpu.matmul %13, %14, %cst_12 {dimension_numbers = #tpu.dot_dimension_numbers<[1], [0], [0], [1], [0, 0, 1, 1], [], []>} : vector<8x128xf32>, vector<128x128xf32>, vector<8x128xf32> -> vector<8x128xf32>
    %16 = vector.broadcast %3 : vector<1x128xf32> to vector<8x128xf32>
    %17 = arith.addf %15, %16 : vector<8x128xf32>
    %c0_13 = arith.constant 0 : index
    %c0_14 = arith.constant 0 : index
    %18 = vector.load %arg6[%c0_13, %c0_14] : memref<8x128xf32, #tpu.memory_space<vmem>>, vector<8x128xf32>
    tpu.vector_store %arg6[%c0_13, %c0_14], %17 {strides = array<i32>} : memref<8x128xf32, #tpu.memory_space<vmem>>, vector<8x128xf32>,
    return
  }
  func.func @transform_0(%arg0: i32) -> (i32, i32) {
    %c0_i32 = arith.constant 0 : i32
    %c0_i32_0 = arith.constant 0 : i32
    return %arg0, %c0_i32 : i32, i32
  }
  func.func @transform_1(%arg0: i32) -> (i32, i32) {
    %c0_i32 = arith.constant 0 : i32
    %c0_i32_0 = arith.constant 0 : i32
    %c0_i32_1 = arith.constant 0 : i32
    return %c0_i32, %c0_i32_0 : i32, i32
  }
  func.func @transform_2(%arg0: i32) -> (i32, i32) {
    %c0_i32 = arith.constant 0 : i32
    %c0_i32_0 = arith.constant 0 : i32
    %c0_i32_1 = arith.constant 0 : i32
    return %c0_i32, %c0_i32_0 : i32, i32
  }
  func.func @transform_3(%arg0: i32) -> (i32, i32) {
    %c0_i32 = arith.constant 0 : i32
    %c0_i32_0 = arith.constant 0 : i32
    %c0_i32_1 = arith.constant 0 : i32
    return %c0_i32, %c0_i32_0 : i32, i32
  }
  func.func @transform_4(%arg0: i32) -> (i32, i32) {
    %c0_i32 = arith.constant 0 : i32
    %c0_i32_0 = arith.constant 0 : i32
    %c0_i32_1 = arith.constant 0 : i32
    return %c0_i32, %c0_i32_0 : i32, i32
  }
  func.func @transform_5(%arg0: i32) -> (i32, i32) {
    %c0_i32 = arith.constant 0 : i32
    %c0_i32_0 = arith.constant 0 : i32
    return %arg0, %c0_i32 : i32, i32
  }
}

</mosaic_0001>

<llo_original>
// kernel: tpu_custom_call.1
$region0: #{tpu_custom_call.1}
  #allocation0 [shape = 'u32[]', space=smem, size = 0x4, offset = 0x4, fixed_abs, tag = 'smem constant byte address 0x4 - core index']
  #allocation1 [shape = 'u32[72,128]{1,0:T(1,128)}', space=vmem, size = 0x9000, scoped, tag = 'internal scratch']
  %s0 = inlined_call_operand.hbm [shape: f32[8,128], index: 0, kind: input, shape index: {}]
  %s1 = inlined_call_operand.hbm [shape: f32[128,128], index: 1, kind: input, shape index: {}]
  %s2 = inlined_call_operand.hbm [shape: f32[128,128], index: 2, kind: input, shape index: {}]
  %s3 = inlined_call_operand.hbm [shape: f32[128,128], index: 3, kind: input, shape index: {}]
  %s4 = inlined_call_operand.hbm [shape: f32[8,128], index: 4, kind: input, shape index: {}]
  %s5 = inlined_call_operand.hbm [shape: f32[8,128], index: 5, kind: output, shape index: {}]
  %s6 = sld [smem:[#allocation0]]
  $region50: #{tpu_custom_call.1} parent=0
    _
  %s8 = ssub.s32 1, %s6
  %s9 = scalar_select 0, %s8, %s6
  $region1: #{tpu_custom_call.1} parent=0
    #allocation2 [shape = 'u8[4096]{0}', space=vmem, size = 0x1000, scoped, tag = 'input window, operand 0, single buffered']
    #allocation3 [shape = 's32[1]{0}', space=sflag, size = 0x4, scoped, tag = 'scoped memory for tpu_custom_call.1']
    #allocation4 [shape = 's32[1]{0}', space=sflag, size = 0x4, scoped, tag = 'scoped memory for tpu_custom_call.1']
    #allocation5 [shape = 'u8[65536]{0}', space=vmem, size = 0x10000, scoped, tag = 'input window, operand 1, single buffered']
    #allocation6 [shape = 's32[1]{0}', space=sflag, size = 0x4, scoped, tag = 'scoped memory for tpu_custom_call.1']
    #allocation7 [shape = 'u8[65536]{0}', space=vmem, size = 0x10000, scoped, tag = 'input window, operand 2, single buffered']
    #allocation8 [shape = 'u8[65536]{0}', space=vmem, size = 0x10000, scoped, tag = 'input window, operand 3, single buffered']
    #allocation9 [shape = 's32[1]{0}', space=sflag, size = 0x4, scoped, tag = 'scoped memory for tpu_custom_call.1']
    #allocation10 [shape = 'u8[4096]{0}', space=vmem, size = 0x1000, scoped, tag = 'input window, operand 4, single buffered']
    #allocation11 [shape = 'u8[4096]{0}', space=vmem, size = 0x1000, scoped, tag = 'output window, operand 0, single buffered']
    %10 = vsyncpa [#allocation3], 0
    %11 = vsyncpa [#allocation6], 0
    %12 = vsyncpa [#allocation9], 0
    %13 = vsyncpa [#allocation4], 0
    // Predicated region
    $region2: #{tpu_custom_call.1} parent=1 // pred_check
      _
    $region3: #{tpu_custom_call.1} parent=1 // pred_check_branch
      %15 = sbr.rel (0) target = $region5
    $region4: #{tpu_custom_call.1} parent=1 // pred_region
      %17 = vsyncadd [#allocation3], 0
      %s19 = sshll.u32 %s0, 4
      %s20 = int_to_ptr.hbm [resolvable:$true] %s19
      %s21 = sshll.u32 [#allocation2], 4
      %s22 = int_to_ptr.vmem [resolvable:$true] %s21
      %24 = dma.hbm_to_vmem [thread:$0]  %s20, 128, %s22, [#allocation3]
    $region5: #{tpu_custom_call.1} parent=1 // pred_fallthru
      _
    // Predicated region
    $region6: #{tpu_custom_call.1} parent=1 // pred_check
      _
    $region7: #{tpu_custom_call.1} parent=1 // pred_check_branch
      %26 = sbr.rel (0) target = $region9
    $region8: #{tpu_custom_call.1} parent=1 // pred_region
      %28 = vsyncadd [#allocation6], 0
      %s29 = sshll.u32 %s1, 4
      %s30 = int_to_ptr.hbm [resolvable:$true] %s29
      %s31 = sshll.u32 [#allocation5], 4
      %s32 = int_to_ptr.vmem [resolvable:$true] %s31
      %37 = dma.hbm_to_vmem [thread:$0]  %s30, 2048, %s32, [#allocation6], 128, 128, 8
    $region9: #{tpu_custom_call.1} parent=1 // pred_fallthru
      _
    // Predicated region
    $region10: #{tpu_custom_call.1} parent=1 // pred_check
      _
    $region11: #{tpu_custom_call.1} parent=1 // pred_check_branch
      %39 = sbr.rel (0) target = $region13
    $region12: #{tpu_custom_call.1} parent=1 // pred_region
      %41 = vsyncadd [#allocation6], 0
      %s42 = sshll.u32 %s2, 4
      %s43 = int_to_ptr.hbm [resolvable:$true] %s42
      %s44 = sshll.u32 [#allocation7], 4
      %s45 = int_to_ptr.vmem [resolvable:$true] %s44
      %50 = dma.hbm_to_vmem [thread:$0]  %s43, 2048, %s45, [#allocation6], 128, 128, 8
    $region13: #{tpu_custom_call.1} parent=1 // pred_fallthru
      _
    // Predicated region
    $region14: #{tpu_custom_call.1} parent=1 // pred_check
      _
    $region15: #{tpu_custom_call.1} parent=1 // pred_check_branch
      %52 = sbr.rel (0) target = $region17
    $region16: #{tpu_custom_call.1} parent=1 // pred_region
      %54 = vsyncadd [#allocation9], 0
      %s55 = sshll.u32 %s3, 4
      %s56 = int_to_ptr.hbm [resolvable:$true] %s55
      %s57 = sshll.u32 [#allocation8], 4
      %s58 = int_to_ptr.vmem [resolvable:$true] %s57
      %63 = dma.hbm_to_vmem [thread:$0]  %s56, 2048, %s58, [#allocation9], 128, 128, 8
    $region17: #{tpu_custom_call.1} parent=1 // pred_fallthru
      _
    // Predicated region
    $region18: #{tpu_custom_call.1} parent=1 // pred_check
      _
    $region19: #{tpu_custom_call.1} parent=1 // pred_check_branch
      %65 = sbr.rel (0) target = $region21
    $region20: #{tpu_custom_call.1} parent=1 // pred_region
      %67 = vsyncadd [#allocation9], 0
      %s69 = sshll.u32 %s4, 4
      %s70 = int_to_ptr.hbm [resolvable:$true] %s69
      %s71 = sshll.u32 [#allocation10], 4
      %s72 = int_to_ptr.vmem [resolvable:$true] %s71
      %74 = dma.hbm_to_vmem [thread:$0]  %s70, 128, %s72, [#allocation9]
    $region21: #{tpu_custom_call.1} parent=1 // pred_fallthru
      _
    // Predicated region
    $region22: #{tpu_custom_call.1} parent=1 // pred_check
      _
    $region23: #{tpu_custom_call.1} parent=1 // pred_check_branch
      %76 = sbr.rel (0) target = $region25
    $region24: #{tpu_custom_call.1} parent=1 // pred_region
      %78 = dma.done [#allocation3], 128
    $region25: #{tpu_custom_call.1} parent=1 // pred_fallthru
      _
    // Predicated region
    $region26: #{tpu_custom_call.1} parent=1 // pred_check
      _
    $region27: #{tpu_custom_call.1} parent=1 // pred_check_branch
      %80 = sbr.rel (0) target = $region29
    $region28: #{tpu_custom_call.1} parent=1 // pred_region
      %82 = dma.done [#allocation6], 2048
    $region29: #{tpu_custom_call.1} parent=1 // pred_fallthru
      _
    // Predicated region
    $region30: #{tpu_custom_call.1} parent=1 // pred_check
      _
    $region31: #{tpu_custom_call.1} parent=1 // pred_check_branch
      %84 = sbr.rel (0) target = $region33
    $region32: #{tpu_custom_call.1} parent=1 // pred_region
      %86 = dma.done [#allocation6], 2048
    $region33: #{tpu_custom_call.1} parent=1 // pred_fallthru
      _
    // Predicated region
    $region34: #{tpu_custom_call.1} parent=1 // pred_check
      _
    $region35: #{tpu_custom_call.1} parent=1 // pred_check_branch
      %88 = sbr.rel (0) target = $region37
    $region36: #{tpu_custom_call.1} parent=1 // pred_region
      %90 = dma.done [#allocation9], 2048
    $region37: #{tpu_custom_call.1} parent=1 // pred_fallthru
      _
    // Predicated region
    $region38: #{tpu_custom_call.1} parent=1 // pred_check
      _
    $region39: #{tpu_custom_call.1} parent=1 // pred_check_branch
      %92 = sbr.rel (0) target = $region41
    $region40: #{tpu_custom_call.1} parent=1 // pred_region
      %94 = dma.done [#allocation9], 128
    $region41: #{tpu_custom_call.1} parent=1 // pred_fallthru
      _
    %v95 = vld [vmem:[#allocation2] sm:$0xff]
    %v96 = vld [vmem:[#allocation10] sm:$0x1]
    %v97 = vld [vmem:[#allocation10 + $0x1] sm:$0x1]
    %v98 = vld [vmem:[#allocation10 + $0x2] sm:$0x1]
    %v99 = vld [vmem:[#allocation5] sm:$0xff]
    %v100 = vld [vmem:[#allocation5 + $0x8] sm:$0xff]
    %v101 = vld [vmem:[#allocation5 + $0x10] sm:$0xff]
    %v102 = vld [vmem:[#allocation5 + $0x18] sm:$0xff]
    %v103 = vld [vmem:[#allocation5 + $0x20] sm:$0xff]
    %v104 = vld [vmem:[#allocation5 + $0x28] sm:$0xff]
    %v105 = vld [vmem:[#allocation5 + $0x30] sm:$0xff]
    %v106 = vld [vmem:[#allocation5 + $0x38] sm:$0xff]
    %v107 = vld [vmem:[#allocation5 + $0x40] sm:$0xff]
    %v108 = vld [vmem:[#allocation5 + $0x48] sm:$0xff]
    %v109 = vld [vmem:[#allocation5 + $0x50] sm:$0xff]
    %v110 = vld [vmem:[#allocation5 + $0x58] sm:$0xff]
    %v111 = vld [vmem:[#allocation5 + $0x60] sm:$0xff]
    %v112 = vld [vmem:[#allocation5 + $0x68] sm:$0xff]
    %v113 = vld [vmem:[#allocation5 + $0x70] sm:$0xff]
    %v114 = vld [vmem:[#allocation5 + $0x78] sm:$0xff]
    %v115 = vperm.slane %v96, 0
    %116 = vmatpush.msra.mxu0 %v114
    %117 = vmatpush.msra.mxu0 %v113
    %118 = vmatpush.msra.mxu0 %v112
    %119 = vmatpush.msra.mxu0 %v111
    %120 = vmatpush.msra.mxu0 %v110
    %121 = vmatpush.msra.mxu0 %v109
    %122 = vmatpush.msra.mxu0 %v108
    %123 = vmatpush.msra.mxu0 %v107
    %124 = vmatpush.msra.mxu0 %v106
    %125 = vmatpush.msra.mxu0 %v105
    %126 = vmatpush.msra.mxu0 %v104
    %127 = vmatpush.msra.mxu0 %v103
    %128 = vmatpush.msra.mxu0 %v102
    %129 = vmatpush.msra.mxu0 %v101
    %130 = vmatpush.msra.mxu0 %v100
    %131 = vmatpush.msra.mxu0 %v99
    %132 = vmatmul.f32.gmra.mxu0 %v95
    %v133 = vpop.f32.mrf.mxu0
    %v134 = vadd.f32 %v115, %v133
    %135 = vdwg.mxu0
    %v136 = vtanh.pop %v134
    %v137 = vld [vmem:[#allocation7] sm:$0xff]
    %v138 = vld [vmem:[#allocation7 + $0x8] sm:$0xff]
    %v139 = vld [vmem:[#allocation7 + $0x10] sm:$0xff]
    %v140 = vld [vmem:[#allocation7 + $0x18] sm:$0xff]
    %v141 = vld [vmem:[#allocation7 + $0x20] sm:$0xff]
    %v142 = vld [vmem:[#allocation7 + $0x28] sm:$0xff]
    %v143 = vld [vmem:[#allocation7 + $0x30] sm:$0xff]
    %v144 = vld [vmem:[#allocation7 + $0x38] sm:$0xff]
    %v145 = vld [vmem:[#allocation7 + $0x40] sm:$0xff]
    %v146 = vld [vmem:[#allocation7 + $0x48] sm:$0xff]
    %v147 = vld [vmem:[#allocation7 + $0x50] sm:$0xff]
    %v148 = vld [vmem:[#allocation7 + $0x58] sm:$0xff]
    %v149 = vld [vmem:[#allocation7 + $0x60] sm:$0xff]
    %v150 = vld [vmem:[#allocation7 + $0x68] sm:$0xff]
    %v151 = vld [vmem:[#allocation7 + $0x70] sm:$0xff]
    %v152 = vld [vmem:[#allocation7 + $0x78] sm:$0xff]
    %v153 = vperm.slane %v97, 0
    %154 = vmatpush.msra.mxu0 %v152
    %155 = vmatpush.msra.mxu0 %v151
    %156 = vmatpush.msra.mxu0 %v150
    %157 = vmatpush.msra.mxu0 %v149
    %158 = vmatpush.msra.mxu0 %v148
    %159 = vmatpush.msra.mxu0 %v147
    %160 = vmatpush.msra.mxu0 %v146
    %161 = vmatpush.msra.mxu0 %v145
    %162 = vmatpush.msra.mxu0 %v144
    %163 = vmatpush.msra.mxu0 %v143
    %164 = vmatpush.msra.mxu0 %v142
    %165 = vmatpush.msra.mxu0 %v141
    %166 = vmatpush.msra.mxu0 %v140
    %167 = vmatpush.msra.mxu0 %v139
    %168 = vmatpush.msra.mxu0 %v138
    %169 = vmatpush.msra.mxu0 %v137
    %170 = vmatmul.f32.gmra.mxu0 %v136
    %v171 = vpop.f32.mrf.mxu0
    %v172 = vadd.f32 %v153, %v171
    %173 = vdwg.mxu0
    %v174 = vtanh.pop %v172
    %v175 = vld [vmem:[#allocation8] sm:$0xff]
    %v176 = vld [vmem:[#allocation8 + $0x8] sm:$0xff]
    %v177 = vld [vmem:[#allocation8 + $0x10] sm:$0xff]
    %v178 = vld [vmem:[#allocation8 + $0x18] sm:$0xff]
    %v179 = vld [vmem:[#allocation8 + $0x20] sm:$0xff]
    %v180 = vld [vmem:[#allocation8 + $0x28] sm:$0xff]
    %v181 = vld [vmem:[#allocation8 + $0x30] sm:$0xff]
    %v182 = vld [vmem:[#allocation8 + $0x38] sm:$0xff]
    %v183 = vld [vmem:[#allocation8 + $0x40] sm:$0xff]
    %v184 = vld [vmem:[#allocation8 + $0x48] sm:$0xff]
    %v185 = vld [vmem:[#allocation8 + $0x50] sm:$0xff]
    %v186 = vld [vmem:[#allocation8 + $0x58] sm:$0xff]
    %v187 = vld [vmem:[#allocation8 + $0x60] sm:$0xff]
    %v188 = vld [vmem:[#allocation8 + $0x68] sm:$0xff]
    %v189 = vld [vmem:[#allocation8 + $0x70] sm:$0xff]
    %v190 = vld [vmem:[#allocation8 + $0x78] sm:$0xff]
    %v191 = vperm.slane %v98, 0
    %192 = vmatpush.msra.mxu0 %v190
    %193 = vmatpush.msra.mxu0 %v189
    %194 = vmatpush.msra.mxu0 %v188
    %195 = vmatpush.msra.mxu0 %v187
    %196 = vmatpush.msra.mxu0 %v186
    %197 = vmatpush.msra.mxu0 %v185
    %198 = vmatpush.msra.mxu0 %v184
    %199 = vmatpush.msra.mxu0 %v183
    %200 = vmatpush.msra.mxu0 %v182
    %201 = vmatpush.msra.mxu0 %v181
    %202 = vmatpush.msra.mxu0 %v180
    %203 = vmatpush.msra.mxu0 %v179
    %204 = vmatpush.msra.mxu0 %v178
    %205 = vmatpush.msra.mxu0 %v177
    %206 = vmatpush.msra.mxu0 %v176
    %207 = vmatpush.msra.mxu0 %v175
    %208 = vmatmul.f32.gmra.mxu0 %v174
    %v209 = vpop.f32.mrf.mxu0
    %v210 = vadd.f32 %v191, %v209
    %211 = vdwg.mxu0
    %212 = vst [vmem:[#allocation11] sm:$0xff] %v210
    // Predicated region
    $region42: #{tpu_custom_call.1} parent=1 // pred_check
      _
    $region43: #{tpu_custom_call.1} parent=1 // pred_check_branch
      %214 = sbr.rel (0) target = $region45
    $region44: #{tpu_custom_call.1} parent=1 // pred_region
      %216 = vsyncadd [#allocation4], 0
      %s218 = sshll.u32 [#allocation11], 4
      %s219 = int_to_ptr.vmem [resolvable:$true] %s218
      %s220 = sshll.u32 %s5, 4
      %s221 = int_to_ptr.hbm [resolvable:$true] %s220
      %223 = dma.vmem_to_hbm [thread:$0]  %s219, 128, %s221, [#allocation4]
    $region45: #{tpu_custom_call.1} parent=1 // pred_fallthru
      _
    // Predicated region
    $region46: #{tpu_custom_call.1} parent=1 // pred_check
      _
    $region47: #{tpu_custom_call.1} parent=1 // pred_check_branch
      %225 = sbr.rel (0) target = $region49
    $region48: #{tpu_custom_call.1} parent=1 // pred_region
      %227 = dma.done [#allocation4], 128
    $region49: #{tpu_custom_call.1} parent=1 // pred_fallthru
      _
    %228 = vsyncpa [#allocation3], 1
    %229 = vsyncpa [#allocation6], 1
    %230 = vsyncpa [#allocation9], 1
    %231 = vsyncpa [#allocation4], 1

</llo_original>
